<compile_context>
chip_gen: v5e
topology: v5e:2x2
jax: 0.10.0
libtpu: 0.0.40
codegen_flags: <defaults>
</compile_context>

<pallas_src>
import functools

import jax
import jax.numpy as jnp
from jax.experimental import pallas as pl
from jax.experimental.pallas import tpu as pltpu


def _round_up(n, m):
    return ((n + m - 1) // m) * m


def _mlp_kernel(x_ref, w1_ref, b1_ref, w2_ref, b2_ref, w3_ref, b3_ref, o_ref):
    """Fused 3-layer MLP on one batch tile; all weights resident in VMEM.

    Matmuls run on the MXU with f32 accumulation; bias + ReLU + sigmoid stay in
    f32 (v5e VPU/EUP have no bf16 path). The optional bf16 cast of x happens
    here (after the tile is already in VMEM), so there is no extra HBM pass.
    """
    x = x_ref[...].astype(w1_ref.dtype)          # no-op on the f32 path
    h1 = jnp.dot(x, w1_ref[...], preferred_element_type=jnp.float32) + b1_ref[...]
    h1 = jnp.maximum(h1, 0.0)
    h2 = jnp.dot(h1.astype(w2_ref.dtype), w2_ref[...],
                 preferred_element_type=jnp.float32) + b2_ref[...]
    h2 = jnp.maximum(h2, 0.0)
    z = jnp.dot(h2.astype(w3_ref.dtype), w3_ref[...],
                preferred_element_type=jnp.float32) + b3_ref[...]
    o_ref[...] = jax.nn.sigmoid(z).astype(o_ref.dtype)


# Scoped-VMEM limit we request (>= v5e's 16 MiB default, <= v7x's 64 MiB physical)
_VMEM_LIMIT_BYTES = 32 << 20
# Working-set budget used to cap the batch tile (leaves headroom for the
# pipeline's double buffers and compiler scratch under the limit above).
_VMEM_TILE_BUDGET = 20 << 20


@functools.partial(jax.jit, static_argnames=("block_b", "use_bf16"))
def impact_factor_forward(x, params, block_b=512, use_bf16=False):
    """x: (B, input_dim). params: dict w1,b1,w2,b2,w3,b3 (weights as (in, out))."""
    out_dtype = x.dtype
    B, D_in = x.shape
    H1 = params["w1"].shape[1]
    H2 = params["w2"].shape[1]
    D_out = params["w3"].shape[1]
    assert params["w1"].shape[0] == D_in
    assert params["w2"].shape[0] == H1 and params["w3"].shape[0] == H2

    w_dtype = jnp.bfloat16 if use_bf16 else x.dtype
    w1 = params["w1"].astype(w_dtype)
    w2 = params["w2"].astype(w_dtype)
    w3 = params["w3"].astype(w_dtype)
    b1 = params["b1"].reshape(1, H1).astype(jnp.float32)
    b2 = params["b2"].reshape(1, H2).astype(jnp.float32)
    b3 = params["b3"].reshape(1, D_out).astype(jnp.float32)

    # Zero-pad hidden widths to 128 lanes: zero cols of w1 give relu(0)=0 hidden
    # units that meet zero rows of w2/w3, so results are unchanged, but bias
    # adds / ReLU / casts run on full vregs and the MXU N-dim fills better.
    H1p = _round_up(H1, 128)
    H2p = _round_up(H2, 128)
    if H1p != H1:
        w1 = jnp.pad(w1, ((0, 0), (0, H1p - H1)))
        b1 = jnp.pad(b1, ((0, 0), (0, H1p - H1)))
        w2 = jnp.pad(w2, ((0, H1p - H1), (0, 0)))
    if H2p != H2:
        w2 = jnp.pad(w2, ((0, 0), (0, H2p - H2)))
        b2 = jnp.pad(b2, ((0, 0), (0, H2p - H2)))
        w3 = jnp.pad(w3, ((0, H2p - H2), (0, 0)))
    # NOTE: D_out is intentionally NOT padded to 128 -- the kernel is DMA-bound,
    # so lane-dense stores are not the binding slot, while padding would 4x the
    # output writeback bytes and force an extra de-pad slice pass.

    # Batch tile: largest tile up to block_b whose working set (double-buffered
    # x/out tiles + f32 intermediates) fits the VMEM budget. No wrapper padding
    # of x: a non-dividing final block is clipped/masked by the Pallas pipeline.
    bytes_per_row = 4 * (2 * (D_in + D_out) + H1p + H2p + D_out) + 2 * D_in
    max_rows = max(8, (_VMEM_TILE_BUDGET // max(bytes_per_row, 1)) // 8 * 8)
    bb = min(block_b, max_rows)

    weight_args = (w1, b1, w2, b2, w3, b3)
    out_shape = jax.ShapeDtypeStruct((B, D_out), out_dtype)

    if B <= bb:
        # Single-block fast path: whole arrays resident in VMEM, no grid/pipeline.
        return pl.pallas_call(
            _mlp_kernel,
            out_shape=out_shape,
            compiler_params=pltpu.CompilerParams(
                vmem_limit_bytes=_VMEM_LIMIT_BYTES),
        )(x, *weight_args)

    bb = max(8, (bb // 8) * 8)        # streamed batch-tile rows: multiple of 8
    rep = lambda shape: pl.BlockSpec(shape, lambda i: (0, 0))
    # (A 3-deep pipeline_mode=pl.Buffered(3) on the x spec is a possible
    #  few-percent win for tiny tiles; omitted for portability.)
    return pl.pallas_call(
        _mlp_kernel,
        out_shape=out_shape,
        grid_spec=pltpu.PrefetchScalarGridSpec(
            num_scalar_prefetch=0,
            grid=(pl.cdiv(B, bb),),
            in_specs=[
                pl.BlockSpec((bb, D_in), lambda i: (i, 0)),   # x tile (streamed)
                rep((D_in, H1p)), rep((1, H1p)),              # fc1 (resident)
                rep((H1p, H2p)), rep((1, H2p)),               # fc2 (resident)
                rep((H2p, D_out)), rep((1, D_out)),           # fc3 (resident)
            ],
            out_specs=pl.BlockSpec((bb, D_out), lambda i: (i, 0)),
        ),
        compiler_params=pltpu.CompilerParams(
            dimension_semantics=("parallel",),       # v7x megacore sharding
            vmem_limit_bytes=_VMEM_LIMIT_BYTES),
    )(x, *weight_args)


def init_params(key, input_dim):
    """Deterministic init mimicking torch.nn.Linear default (uniform +-1/sqrt(fan_in))."""
    dims = [(input_dim, 64), (64, 32), (32, input_dim)]
    params = {}
    keys = jax.random.split(key, 2 * len(dims))
    for idx, (fan_in, fan_out) in enumerate(dims):
        bound = 1.0 / (fan_in ** 0.5)
        params[f"w{idx+1}"] = jax.random.uniform(
            keys[2 * idx], (fan_in, fan_out), jnp.float32, -bound, bound)
        params[f"b{idx+1}"] = jax.random.uniform(
            keys[2 * idx + 1], (fan_out,), jnp.float32, -bound, bound)
    return params


def _reference(x, params):
    h1 = jnp.maximum(x @ params["w1"] + params["b1"], 0.0)
    h2 = jnp.maximum(h1 @ params["w2"] + params["b2"], 0.0)
    return jax.nn.sigmoid(h2 @ params["w3"] + params["b3"])


if __name__ == "__main__":
    key = jax.random.PRNGKey(0)
    k_x, k_p = jax.random.split(key)

    input_dim = 32
    params = init_params(k_p, input_dim)

    # 1) Small batch, f32 default: single-block fast path.
    x = jax.random.normal(k_x, (8, input_dim), dtype=jnp.float32)
    out = jax.block_until_ready(impact_factor_forward(x, params))
    ref = _reference(x, params)
    assert out.shape == (8, input_dim)
    assert jnp.allclose(out, ref, atol=2e-2, rtol=2e-2)

    # 2) Optional bf16-matmul variant (x cast happens inside the kernel).
    out_bf16 = jax.block_until_ready(
        impact_factor_forward(x, params, use_bf16=True))
    assert jnp.allclose(out_bf16, ref, atol=2e-2, rtol=2e-2)

    # 3) Ragged batch through the tiled path (3 grid steps, last block clipped
    #    by the pipeline -- no wrapper-side padding of x).
    x2 = jax.random.normal(k_x, (300, input_dim), dtype=jnp.float32)
    out2 = jax.block_until_ready(impact_factor_forward(x2, params, block_b=128))
    ref2 = _reference(x2, params)
    assert out2.shape == (300, input_dim)
    assert jnp.allclose(out2, ref2, atol=2e-2, rtol=2e-2)

    # 4) Evenly-dividing multi-block path (2 grid steps).
    x3 = jax.random.normal(k_x, (256, input_dim), dtype=jnp.float32)
    out3 = jax.block_until_ready(impact_factor_forward(x3, params, block_b=128))
    ref3 = _reference(x3, params)
    assert out3.shape == (256, input_dim)
    assert jnp.allclose(out3, ref3, atol=2e-2, rtol=2e-2)

    print("KERNEL_OK")
</pallas_src>

<mosaic_0001>
module attributes {stable_mosaic.version = 11 : i64} {
  func.func @_mlp_kernel(%arg0: memref<8x32xf32, #tpu.memory_space<vmem>>, %arg1: memref<32x128xf32, #tpu.memory_space<vmem>>, %arg2: memref<1x128xf32, #tpu.memory_space<vmem>>, %arg3: memref<128x128xf32, #tpu.memory_space<vmem>>, %arg4: memref<1x128xf32, #tpu.memory_space<vmem>>, %arg5: memref<128x32xf32, #tpu.memory_space<vmem>>, %arg6: memref<1x32xf32, #tpu.memory_space<vmem>>, %arg7: memref<8x32xf32, #tpu.memory_space<vmem>>) attributes {dimension_semantics = [], scalar_prefetch = 0 : i64, scratch_operands = 0 : i64, tpu.core_type = #tpu.core_type<tc>} {
    %c0 = arith.constant 0 : index
    %c0_0 = arith.constant 0 : index
    %0 = vector.load %arg0[%c0, %c0_0] : memref<8x32xf32, #tpu.memory_space<vmem>>, vector<8x32xf32>
    %c0_1 = arith.constant 0 : index
    %c0_2 = arith.constant 0 : index
    %1 = vector.load %arg1[%c0_1, %c0_2] : memref<32x128xf32, #tpu.memory_space<vmem>>, vector<32x128xf32>
    %cst = arith.constant dense<0.000000e+00> : vector<8x128xf32>
    %2 = tpu.matmul %0, %1, %cst {dimension_numbers = #tpu.dot_dimension_numbers<[1], [0], [0], [1], [0, 0, 1, 1], [], []>} : vector<8x32xf32>, vector<32x128xf32>, vector<8x128xf32> -> vector<8x128xf32>
    %c0_3 = arith.constant 0 : index
    %c0_4 = arith.constant 0 : index
    %3 = vector.load %arg2[%c0_3, %c0_4] : memref<1x128xf32, #tpu.memory_space<vmem>>, vector<1x128xf32>
    %4 = vector.broadcast %3 : vector<1x128xf32> to vector<8x128xf32>
    %5 = arith.addf %2, %4 : vector<8x128xf32>
    %cst_5 = arith.constant 0.000000e+00 : f32
    %6 = vector.broadcast %cst_5 : f32 to vector<8x128xf32>
    %7 = arith.maximumf %5, %6 : vector<8x128xf32>
    %c0_6 = arith.constant 0 : index
    %c0_7 = arith.constant 0 : index
    %8 = vector.load %arg3[%c0_6, %c0_7] : memref<128x128xf32, #tpu.memory_space<vmem>>, vector<128x128xf32>
    %cst_8 = arith.constant dense<0.000000e+00> : vector<8x128xf32>
    %9 = tpu.matmul %7, %8, %cst_8 {dimension_numbers = #tpu.dot_dimension_numbers<[1], [0], [0], [1], [0, 0, 1, 1], [], []>} : vector<8x128xf32>, vector<128x128xf32>, vector<8x128xf32> -> vector<8x128xf32>
    %c0_9 = arith.constant 0 : index
    %c0_10 = arith.constant 0 : index
    %10 = vector.load %arg4[%c0_9, %c0_10] : memref<1x128xf32, #tpu.memory_space<vmem>>, vector<1x128xf32>
    %11 = vector.broadcast %10 : vector<1x128xf32> to vector<8x128xf32>
    %12 = arith.addf %9, %11 : vector<8x128xf32>
    %cst_11 = arith.constant 0.000000e+00 : f32
    %13 = vector.broadcast %cst_11 : f32 to vector<8x128xf32>
    %14 = arith.maximumf %12, %13 : vector<8x128xf32>
    %c0_12 = arith.constant 0 : index
    %c0_13 = arith.constant 0 : index
    %15 = vector.load %arg5[%c0_12, %c0_13] : memref<128x32xf32, #tpu.memory_space<vmem>>, vector<128x32xf32>
    %cst_14 = arith.constant dense<0.000000e+00> : vector<8x32xf32>
    %16 = tpu.matmul %14, %15, %cst_14 {dimension_numbers = #tpu.dot_dimension_numbers<[1], [0], [0], [1], [0, 0, 1, 1], [], []>} : vector<8x128xf32>, vector<128x32xf32>, vector<8x32xf32> -> vector<8x32xf32>
    %c0_15 = arith.constant 0 : index
    %c0_16 = arith.constant 0 : index
    %17 = vector.load %arg6[%c0_15, %c0_16] : memref<1x32xf32, #tpu.memory_space<vmem>>, vector<1x32xf32>
    %18 = vector.broadcast %17 : vector<1x32xf32> to vector<8x32xf32>
    %19 = arith.addf %16, %18 : vector<8x32xf32>
    %20 = arith.negf %19 : vector<8x32xf32>
    %21 = math.exp %20 : vector<8x32xf32>
    %cst_17 = arith.constant 1.000000e+00 : f32
    %22 = vector.broadcast %cst_17 : f32 to vector<8x32xf32>
    %23 = arith.addf %22, %21 : vector<8x32xf32>
    %24 = arith.divf %22, %23 : vector<8x32xf32>
    %c0_18 = arith.constant 0 : index
    %c0_19 = arith.constant 0 : index
    %25 = vector.load %arg7[%c0_18, %c0_19] : memref<8x32xf32, #tpu.memory_space<vmem>>, vector<8x32xf32>
    tpu.vector_store %arg7[%c0_18, %c0_19], %24 {strides = array<i32>} : memref<8x32xf32, #tpu.memory_space<vmem>>, vector<8x32xf32>,
    return
  }
}

</mosaic_0001>

<llo_original>
// kernel: impact_factor_forward.1
$region0: #{impact_factor_forward.1}
  #allocation0 [shape = 'u32[]', space=smem, size = 0x4, offset = 0x4, fixed_abs, tag = 'smem constant byte address 0x4 - core index']
  #allocation1 [shape = 'u32[72,128]{1,0:T(1,128)}', space=vmem, size = 0x9000, scoped, tag = 'internal scratch']
  %s0 = inlined_call_operand.vmem [shape: f32[8,32], index: 0, kind: input, shape index: {}]
  %s1 = inlined_call_operand.vmem [shape: f32[32,128], index: 1, kind: input, shape index: {}]
  %s2 = inlined_call_operand.vmem [shape: f32[1,128], index: 2, kind: input, shape index: {}]
  %s3 = inlined_call_operand.vmem [shape: f32[128,128], index: 3, kind: input, shape index: {}]
  %s4 = inlined_call_operand.vmem [shape: f32[1,128], index: 4, kind: input, shape index: {}]
  %s5 = inlined_call_operand.vmem [shape: f32[128,32], index: 5, kind: input, shape index: {}]
  %s6 = inlined_call_operand.vmem [shape: f32[1,32], index: 6, kind: input, shape index: {}]
  %s7 = inlined_call_operand.hbm [shape: f32[8,32], index: 7, kind: output, shape index: {}]
  %s8 = sld [smem:[#allocation0]]
  $region38: #{impact_factor_forward.1} parent=0
    _
  %s10 = ssub.s32 1, %s8
  %s11 = scalar_select 0, %s10, %s8
  $region1: #{impact_factor_forward.1} parent=0
    #allocation2 [shape = 'u8[4096]{0}', space=vmem, size = 0x1000, scoped, tag = 'output window, operand 0, single buffered']
    #allocation3 [shape = 's32[1]{0}', space=sflag, size = 0x4, scoped, tag = 'scoped memory for impact_factor_forward.1']
    %12 = vsyncpa [#allocation3], 0
    // Predicated region
    $region2: #{impact_factor_forward.1} parent=1 // pred_check
      _
    $region3: #{impact_factor_forward.1} parent=1 // pred_check_branch
      %14 = sbr.rel (0) target = $region5
    $region4: #{impact_factor_forward.1} parent=1 // pred_region
      _
    $region5: #{impact_factor_forward.1} parent=1 // pred_fallthru
      _
    // Predicated region
    $region6: #{impact_factor_forward.1} parent=1 // pred_check
      _
    $region7: #{impact_factor_forward.1} parent=1 // pred_check_branch
      %16 = sbr.rel (0) target = $region9
    $region8: #{impact_factor_forward.1} parent=1 // pred_region
      _
    $region9: #{impact_factor_forward.1} parent=1 // pred_fallthru
      _
    // Predicated region
    $region10: #{impact_factor_forward.1} parent=1 // pred_check
      _
    $region11: #{impact_factor_forward.1} parent=1 // pred_check_branch
      %18 = sbr.rel (0) target = $region13
    $region12: #{impact_factor_forward.1} parent=1 // pred_region
      _
    $region13: #{impact_factor_forward.1} parent=1 // pred_fallthru
      _
    // Predicated region
    $region14: #{impact_factor_forward.1} parent=1 // pred_check
      _
    $region15: #{impact_factor_forward.1} parent=1 // pred_check_branch
      %20 = sbr.rel (0) target = $region17
    $region16: #{impact_factor_forward.1} parent=1 // pred_region
      _
    $region17: #{impact_factor_forward.1} parent=1 // pred_fallthru
      _
    // Predicated region
    $region18: #{impact_factor_forward.1} parent=1 // pred_check
      _
    $region19: #{impact_factor_forward.1} parent=1 // pred_check_branch
      %22 = sbr.rel (0) target = $region21
    $region20: #{impact_factor_forward.1} parent=1 // pred_region
      _
    $region21: #{impact_factor_forward.1} parent=1 // pred_fallthru
      _
    // Predicated region
    $region22: #{impact_factor_forward.1} parent=1 // pred_check
      _
    $region23: #{impact_factor_forward.1} parent=1 // pred_check_branch
      %24 = sbr.rel (0) target = $region25
    $region24: #{impact_factor_forward.1} parent=1 // pred_region
      _
    $region25: #{impact_factor_forward.1} parent=1 // pred_fallthru
      _
    // Predicated region
    $region26: #{impact_factor_forward.1} parent=1 // pred_check
      _
    $region27: #{impact_factor_forward.1} parent=1 // pred_check_branch
      %26 = sbr.rel (0) target = $region29
    $region28: #{impact_factor_forward.1} parent=1 // pred_region
      _
    $region29: #{impact_factor_forward.1} parent=1 // pred_fallthru
      _
    %v27 = vld [vmem:[%s0] sm:$0xff]
    %v28 = vld [vmem:[%s1] sm:$0xff]
    %v29 = vld [vmem:[%s1 + $0x8] sm:$0xff]
    %v30 = vld [vmem:[%s1 + $0x10] sm:$0xff]
    %v31 = vld [vmem:[%s1 + $0x18] sm:$0xff]
    %v32 = vld [vmem:[%s2] sm:$0x1]
    %v34 = vperm.slane %v32, 0
    %vm36 = vcmask 261120
    %v38 = vsel %vm36, %v27, 0
    %40 = vmatpush.msra.mxu0 0.0
    %41 = vmatpush.msra.mxu0 0.0
    %42 = vmatpush.msra.mxu0 0.0
    %43 = vmatpush.msra.mxu0 0.0
    %44 = vmatpush.msra.mxu0 0.0
    %45 = vmatpush.msra.mxu0 0.0
    %46 = vmatpush.msra.mxu0 0.0
    %47 = vmatpush.msra.mxu0 0.0
    %48 = vmatpush.msra.mxu0 0.0
    %49 = vmatpush.msra.mxu0 0.0
    %50 = vmatpush.msra.mxu0 0.0
    %51 = vmatpush.msra.mxu0 0.0
    %52 = vmatpush.msra.mxu0 %v31
    %53 = vmatpush.msra.mxu0 %v30
    %54 = vmatpush.msra.mxu0 %v29
    %55 = vmatpush.msra.mxu0 %v28
    %56 = vmatmul.f32.gmra.mxu0 %v38
    %v57 = vpop.f32.mrf.mxu0
    %v58 = vadd.f32 %v34, %v57
    %59 = vdwg.mxu0
    %v60 = vmax.f32 %v58, 0.0
    %v61 = vld [vmem:[%s3] sm:$0xff]
    %v62 = vld [vmem:[%s3 + $0x8] sm:$0xff]
    %v63 = vld [vmem:[%s3 + $0x10] sm:$0xff]
    %v64 = vld [vmem:[%s3 + $0x18] sm:$0xff]
    %v65 = vld [vmem:[%s3 + $0x20] sm:$0xff]
    %v66 = vld [vmem:[%s3 + $0x28] sm:$0xff]
    %v67 = vld [vmem:[%s3 + $0x30] sm:$0xff]
    %v68 = vld [vmem:[%s3 + $0x38] sm:$0xff]
    %v69 = vld [vmem:[%s3 + $0x40] sm:$0xff]
    %v70 = vld [vmem:[%s3 + $0x48] sm:$0xff]
    %v71 = vld [vmem:[%s3 + $0x50] sm:$0xff]
    %v72 = vld [vmem:[%s3 + $0x58] sm:$0xff]
    %v73 = vld [vmem:[%s3 + $0x60] sm:$0xff]
    %v74 = vld [vmem:[%s3 + $0x68] sm:$0xff]
    %v75 = vld [vmem:[%s3 + $0x70] sm:$0xff]
    %v76 = vld [vmem:[%s3 + $0x78] sm:$0xff]
    %v77 = vld [vmem:[%s4] sm:$0x1]
    %v79 = vperm.slane %v77, 0
    %81 = vmatpush.msra.mxu0 %v76
    %82 = vmatpush.msra.mxu0 %v75
    %83 = vmatpush.msra.mxu0 %v74
    %84 = vmatpush.msra.mxu0 %v73
    %85 = vmatpush.msra.mxu0 %v72
    %86 = vmatpush.msra.mxu0 %v71
    %87 = vmatpush.msra.mxu0 %v70
    %88 = vmatpush.msra.mxu0 %v69
    %89 = vmatpush.msra.mxu0 %v68
    %90 = vmatpush.msra.mxu0 %v67
    %91 = vmatpush.msra.mxu0 %v66
    %92 = vmatpush.msra.mxu0 %v65
    %93 = vmatpush.msra.mxu0 %v64
    %94 = vmatpush.msra.mxu0 %v63
    %95 = vmatpush.msra.mxu0 %v62
    %96 = vmatpush.msra.mxu0 %v61
    %97 = vmatmul.f32.gmra.mxu0 %v60
    %v98 = vpop.f32.mrf.mxu0
    %v99 = vadd.f32 %v79, %v98
    %100 = vdwg.mxu0
    %v101 = vmax.f32 %v99, 0.0
    %v102 = vld [vmem:[%s5] sm:$0xff]
    %v103 = vld [vmem:[%s5 + $0x8] sm:$0xff]
    %v104 = vld [vmem:[%s5 + $0x10] sm:$0xff]
    %v105 = vld [vmem:[%s5 + $0x18] sm:$0xff]
    %v106 = vld [vmem:[%s5 + $0x20] sm:$0xff]
    %v107 = vld [vmem:[%s5 + $0x28] sm:$0xff]
    %v108 = vld [vmem:[%s5 + $0x30] sm:$0xff]
    %v109 = vld [vmem:[%s5 + $0x38] sm:$0xff]
    %v110 = vld [vmem:[%s5 + $0x40] sm:$0xff]
    %v111 = vld [vmem:[%s5 + $0x48] sm:$0xff]
    %v112 = vld [vmem:[%s5 + $0x50] sm:$0xff]
    %v113 = vld [vmem:[%s5 + $0x58] sm:$0xff]
    %v114 = vld [vmem:[%s5 + $0x60] sm:$0xff]
    %v115 = vld [vmem:[%s5 + $0x68] sm:$0xff]
    %v116 = vld [vmem:[%s5 + $0x70] sm:$0xff]
    %v117 = vld [vmem:[%s5 + $0x78] sm:$0xff]
    %v118 = vld [vmem:[%s6] sm:$0x1]
    %v120 = vperm.slane %v118, 0
    %122 = vmatpush.msra.mxu0 %v117
    %123 = vmatpush.msra.mxu0 %v116
    %124 = vmatpush.msra.mxu0 %v115
    %125 = vmatpush.msra.mxu0 %v114
    %126 = vmatpush.msra.mxu0 %v113
    %127 = vmatpush.msra.mxu0 %v112
    %128 = vmatpush.msra.mxu0 %v111
    %129 = vmatpush.msra.mxu0 %v110
    %130 = vmatpush.msra.mxu0 %v109
    %131 = vmatpush.msra.mxu0 %v108
    %132 = vmatpush.msra.mxu0 %v107
    %133 = vmatpush.msra.mxu0 %v106
    %134 = vmatpush.msra.mxu0 %v105
    %135 = vmatpush.msra.mxu0 %v104
    %136 = vmatpush.msra.mxu0 %v103
    %137 = vmatpush.msra.mxu0 %v102
    %138 = vmatmul.f32.gmra.mxu0 %v101
    %v139 = vpop.f32.mrf.mxu0
    %v140 = vadd.f32 %v120, %v139
    %141 = vdwg.mxu0
    %v142 = vxor.u32 %v140, 2147483648
    %v143 = vmul.f32 %v142, 1.442695
    %v144 = vpow.pop %v143
    %v145 = vadd.f32 %v144, 1.0
    %v146 = vrcp.pop %v145
    %v147 = vmul.f32 %v145, %v146
    %v148 = vsub.f32 1.0, %v147
    %v149 = vmul.f32 %v146, %v148
    %v150 = vadd.f32 %v146, %v149
    %vm151 = vweird.f32 %v145
    %vm152 = vweird.f32 %v146
    %vm153 = vmor %vm151, %vm152
    %v154 = vsel %vm153, %v146, %v150
    %v155 = vand.u32 2147483647, %v145
    %vm156 = vcmp.eq.f32.partialorder %v155, 8.507059e+37
    %v157 = vand.u32 %v145, 2147483648
    %v158 = vor.u32 1.1754944e-38, %v157
    %v159 = vsel %vm156, %v158, %v154
    %v160 = vmul.f32 1.0, %v159
    %161 = vst.msk [vmem:[#allocation2] sm:$0xff] %vm36, %v160
    // Predicated region
    $region30: #{impact_factor_forward.1} parent=1 // pred_check
      _
    $region31: #{impact_factor_forward.1} parent=1 // pred_check_branch
      %163 = sbr.rel (0) target = $region33
    $region32: #{impact_factor_forward.1} parent=1 // pred_region
      %165 = vsyncadd [#allocation3], 0
      %s167 = sshll.u32 [#allocation2], 4
      %s168 = int_to_ptr.vmem [resolvable:$true] %s167
      %s169 = sshll.u32 %s7, 4
      %s170 = int_to_ptr.hbm [resolvable:$true] %s169
      %172 = dma.vmem_to_hbm [thread:$0]  %s168, 128, %s170, [#allocation3]
    $region33: #{impact_factor_forward.1} parent=1 // pred_fallthru
      _
    // Predicated region
    $region34: #{impact_factor_forward.1} parent=1 // pred_check
      _
    $region35: #{impact_factor_forward.1} parent=1 // pred_check_branch
      %174 = sbr.rel (0) target = $region37
    $region36: #{impact_factor_forward.1} parent=1 // pred_region
      %176 = dma.done [#allocation3], 128
    $region37: #{impact_factor_forward.1} parent=1 // pred_fallthru
      _
    %177 = vsyncpa [#allocation3], 1

</llo_original>
